<compile_context>
chip_gen: v7x
topology: tpu7x:2x2x1
jax: 0.10.0
libtpu: 0.0.40
codegen_flags: <defaults>
</compile_context>

<pallas_src>
import functools
import math

import jax
import jax.numpy as jnp
from jax.experimental import pallas as pl
from jax.experimental.pallas import tpu as pltpu


_COMPUTE_DTYPE = jnp.bfloat16          # MXU input / activation dtype; accumulation is f32.
_VMEM_LIMIT = 40 * 1024 * 1024         # conservative scoped-VMEM budget (fits v7x 64 MiB/TC)


def _pick_lane_tile(nl: int) -> int:
    """Largest 128-multiple lane tile dividing nl (capped for v7x VMEM), else full extent.

    At the tiny demo shapes nl < 128, so the full (single-block) extent is used; for
    real shapes keep N*L a multiple of 128 so every load/store stays unmasked.
    """
    if nl % 128 == 0:
        for t in (512, 256, 128):
            if nl % t == 0:
                return t
    return nl


def _silu_f32(y):
    # SiLU in f32; exp + approx reciprocal both live on the EUP slot.
    return y * pl.reciprocal(1.0 + jnp.exp(-y), approx=True)


# ----------------------------------------------------------------------------
# Pallas kernels
# ----------------------------------------------------------------------------
def _conv_bn_act_kernel(act: bool):
    """(Cout,K*Cin) @ (K*Cin,TL) matmul + folded-BN bias + optional SiLU, one dense store."""

    def kernel(x_ref, w_ref, b_ref, o_ref):
        y = jnp.dot(w_ref[...], x_ref[...], preferred_element_type=jnp.float32)
        y = y + b_ref[...]
        if act:
            y = _silu_f32(y)
        o_ref[...] = y.astype(o_ref.dtype)

    return kernel


def _c2f_kernel(splits, chans):
    """Fully fused C2F: 1x1 conv, all bottlenecks (2 matmuls + residual each), channel
    concat and the shortcut add — everything for one lane tile in a single kernel, so
    no (C/2, N*L) intermediate ever round-trips through HBM."""
    nb = len(splits)

    def kernel(*refs):
        x_ref, cw_ref, cb_ref = refs[:3]
        bn_refs = refs[3:3 + 4 * nb]
        o_ref = refs[3 + 4 * nb]

        x = x_ref[...]                                           # bf16 (C, TL)
        xf = x.astype(jnp.float32)                               # shortcut, f32
        y = jnp.dot(cw_ref[...], x, preferred_element_type=jnp.float32) + cb_ref[...]
        y = _silu_f32(y)                                         # f32 (C, TL)

        off = 0
        for j in range(nb):
            w_in, b_in, w_out, b_out = bn_refs[4 * j:4 * j + 4]
            sc, ch = splits[j], chans[j]
            # first split piece goes straight to its output slab (+ shortcut)
            o_ref[off:off + sc, :] = (y[:sc] + xf[off:off + sc]).astype(o_ref.dtype)
            off += sc
            # bottleneck on the remaining channels, intermediate kept on-chip in f32
            rest = y[sc:sc + ch]
            h = _silu_f32(jnp.dot(w_in[...], rest.astype(_COMPUTE_DTYPE),
                                  preferred_element_type=jnp.float32) + b_in[...])
            y = _silu_f32(jnp.dot(w_out[...], h.astype(_COMPUTE_DTYPE),
                                  preferred_element_type=jnp.float32) + b_out[...]) + rest
        # last concat piece (+ shortcut)
        o_ref[off:, :] = (y + xf[off:, :]).astype(o_ref.dtype)

    return kernel


# ----------------------------------------------------------------------------
# pallas_call wrappers
# ----------------------------------------------------------------------------
def conv_bn_act(x2d, w2d, bias, *, act=True):
    """x2d: (K*Cin, NL) bf16, w2d: (Cout, K*Cin) bf16 (BN folded), bias: (Cout, 1) f32."""
    cin_k, nl = x2d.shape
    cout = w2d.shape[0]
    tl = _pick_lane_tile(nl)
    return pl.pallas_call(
        _conv_bn_act_kernel(act),
        out_shape=jax.ShapeDtypeStruct((cout, nl), _COMPUTE_DTYPE),
        grid=(nl // tl,),
        in_specs=[pl.BlockSpec((cin_k, tl), lambda t: (0, t)),
                  pl.BlockSpec((cout, cin_k), lambda t: (0, 0)),
                  pl.BlockSpec((cout, 1), lambda t: (0, 0))],
        out_specs=pl.BlockSpec((cout, tl), lambda t: (0, t)),
        compiler_params=pltpu.CompilerParams(
            dimension_semantics=("parallel",), vmem_limit_bytes=_VMEM_LIMIT),
    )(x2d, w2d, bias)


def c2f_fused(x2d, conv_wb, bn_wbs, splits, chans):
    """One pallas_call for a whole C2F block (conv + bottlenecks + concat + shortcut)."""
    cin, nl = x2d.shape
    cw, cb = conv_wb
    cout = cw.shape[0]
    tl = _pick_lane_tile(nl)

    in_specs = [pl.BlockSpec((cin, tl), lambda t: (0, t)),
                pl.BlockSpec(cw.shape, lambda t: (0, 0)),
                pl.BlockSpec(cb.shape, lambda t: (0, 0))]
    args = [x2d, cw, cb]
    for wb in bn_wbs:                       # (w_in, b_in, w_out, b_out), all tiny, full blocks
        for a in wb:
            in_specs.append(pl.BlockSpec(a.shape, lambda t: (0, 0)))
            args.append(a)

    return pl.pallas_call(
        _c2f_kernel(tuple(splits), tuple(chans)),
        out_shape=jax.ShapeDtypeStruct((cout, nl), _COMPUTE_DTYPE),
        grid=(nl // tl,),
        in_specs=in_specs,
        out_specs=pl.BlockSpec((cout, tl), lambda t: (0, t)),
        compiler_params=pltpu.CompilerParams(
            dimension_semantics=("parallel",), vmem_limit_bytes=_VMEM_LIMIT),
    )(*args)


# ----------------------------------------------------------------------------
# Parameter construction (deterministic, mirrors the PyTorch module shapes)
# ----------------------------------------------------------------------------
def make_conv_params(key, cin, cout, k):
    kw, kg, kb, km, kv = jax.random.split(key, 5)
    fan = cin * k
    return dict(
        w=jax.random.normal(kw, (cout, cin, k), jnp.float32) / math.sqrt(fan),
        gamma=1.0 + 0.1 * jax.random.normal(kg, (cout,), jnp.float32),
        beta=0.1 * jax.random.normal(kb, (cout,), jnp.float32),
        mean=0.1 * jax.random.normal(km, (cout,), jnp.float32),
        var=jax.random.uniform(kv, (cout,), jnp.float32, minval=0.5, maxval=1.5),
    )


def make_bottleneck_params(key, channels):
    k1, k2 = jax.random.split(key)
    bottle = channels // 2
    return dict(layer_in=make_conv_params(k1, channels, bottle, 1),
                layer_out=make_conv_params(k2, bottle, channels, 1))


def make_c2f_params(key, cin, cout, num_bottle_neck):
    keys = jax.random.split(key, num_bottle_neck + 1)
    conv = make_conv_params(keys[0], cin, cout, 1)
    split_list, channels_list, bns = [], [], []
    oc = cout
    for j in range(num_bottle_neck):
        split_list.append(oc // 2)
        oc = oc - oc // 2
        channels_list.append(oc)
        bns.append(make_bottleneck_params(keys[j + 1], oc))
    return dict(conv=conv, split=split_list, chans=channels_list, bns=bns)


def make_backbone_params(key, in_channels, out_channels):
    n_pairs = len(out_channels) - 1
    keys = jax.random.split(key, 1 + 2 * n_pairs)
    params = dict(in_conv=make_conv_params(keys[0], in_channels, out_channels[0], 3),
                  layers=[])
    for i in range(n_pairs):
        params["layers"].append(
            ("conv", make_conv_params(keys[1 + 2 * i], out_channels[i], out_channels[i + 1], 3)))
        params["layers"].append(
            ("c2f", make_c2f_params(keys[2 + 2 * i], out_channels[i + 1], out_channels[i + 1],
                                    3 * i // 2)))
    return params


# ----------------------------------------------------------------------------
# BN folding (eval mode) into weights / bias
# ----------------------------------------------------------------------------
def _fold_bn(p, eps=1e-5):
    scale = p["gamma"] / jnp.sqrt(p["var"] + eps)
    bias = (p["beta"] - p["mean"] * scale).reshape(-1, 1).astype(jnp.float32)
    return scale, bias


def fold_pointwise(p):
    scale, bias = _fold_bn(p)
    w = p["w"][:, :, 0] * scale[:, None]                         # (Cout, Cin)
    return w.astype(_COMPUTE_DTYPE), bias


def fold_strided(p):
    """Fold BN and stack the 3 taps along the contraction dim: (Cout, 3*Cin), (k, ci) order."""
    scale, bias = _fold_bn(p)
    w = p["w"] * scale[:, None, None]                            # (Cout, Cin, 3)
    cout, cin, k = w.shape
    w = jnp.transpose(w, (0, 2, 1)).reshape(cout, k * cin)       # column index = k*Cin + ci
    return w.astype(_COMPUTE_DTYPE), bias


def strided_taps(x3):
    """x3: (C, N, L) -> (3*C, N*Lout) tap-stacked columns for Conv1d(k=3, s=2, p=1).

    Row block k holds x_pad[:, 2t+k]; built with one pad + phase gather in XLA (no
    transpose, no per-stage layout change — the activation stays channel-major)."""
    c, n, l = x3.shape
    assert l % 2 == 0, "stride-2/pad-1 conv here expects even length"
    lout = l // 2
    xp = jnp.pad(x3, ((0, 0), (0, 0), (1, 1))).reshape(c, n, lout + 1, 2)
    cols = jnp.concatenate([xp[:, :, :lout, 0],      # tap k=0 : x_pad[2t]   (even phase)
                            xp[:, :, :lout, 1],      # tap k=1 : x_pad[2t+1] (odd phase)
                            xp[:, :, 1:, 0]],        # tap k=2 : x_pad[2t+2] (shifted even)
                           axis=0)                   # (3C, N, Lout)
    return cols.reshape(3 * c, n * lout), lout


# ----------------------------------------------------------------------------
# Forward pass (glue in JAX; all heavy compute inside the Pallas kernels)
# ----------------------------------------------------------------------------
def strided_conv_forward(p, x3, *, act=True):
    w, b = fold_strided(p)
    cols, lout = strided_taps(x3)
    return conv_bn_act(cols, w, b, act=act), lout


def c2f_forward(p, x2d):
    conv_wb = fold_pointwise(p["conv"])
    bn_wbs = []
    for bp in p["bns"]:
        w_in, b_in = fold_pointwise(bp["layer_in"])
        w_out, b_out = fold_pointwise(bp["layer_out"])
        bn_wbs.append((w_in, b_in, w_out, b_out))
    return c2f_fused(x2d, conv_wb, bn_wbs, p["split"], p["chans"])


def backbone_forward(params, x):
    """x: (N, Cin, L) f32 NCL (like PyTorch). Returns one (N, C, L') tensor per C2F stage."""
    n, _, l = x.shape
    x3 = jnp.transpose(x, (1, 0, 2)).astype(_COMPUTE_DTYPE)     # (Cin, N, L), done once
    y, lcur = strided_conv_forward(params["in_conv"], x3)       # -> (C0, N*L/2) channel-major
    out = []
    for kind, p in params["layers"]:
        if kind == "conv":
            c = y.shape[0]
            y, lcur = strided_conv_forward(p, y.reshape(c, n, lcur))   # reshape only, no transpose
        else:
            y = c2f_forward(p, y)
            c = y.shape[0]
            out.append(jnp.transpose(y.reshape(c, n, lcur), (1, 0, 2)))
    return out


# ----------------------------------------------------------------------------
# Pure-JAX fp32 reference (eval-mode), used for a tolerance check
# ----------------------------------------------------------------------------
def _ref_conv(p, x, stride, pad, act=True, eps=1e-5):
    y = jax.lax.conv_general_dilated(
        x, p["w"], window_strides=(stride,), padding=[(pad, pad)],
        dimension_numbers=("NCH", "OIH", "NCH"),
        precision=jax.lax.Precision.HIGHEST)
    scale = p["gamma"] / jnp.sqrt(p["var"] + eps)
    y = y * scale[None, :, None] + (p["beta"] - p["mean"] * scale)[None, :, None]
    return y * jax.nn.sigmoid(y) if act else y


def _ref_bottleneck(p, x):
    h = _ref_conv(p["layer_in"], x, 1, 0)
    return _ref_conv(p["layer_out"], h, 1, 0) + x


def _ref_c2f(p, x):
    res = x
    y = _ref_conv(p["conv"], x, 1, 0)
    pieces = []
    for bp, sc, ch in zip(p["bns"], p["split"], p["chans"]):
        pieces.append(y[:, :sc])
        y = _ref_bottleneck(bp, y[:, sc:sc + ch])
    pieces.append(y)
    return jnp.concatenate(pieces, axis=1) + res


def _ref_backbone(params, x):
    y = _ref_conv(params["in_conv"], x, 2, 1)
    out = []
    for kind, p in params["layers"]:
        if kind == "conv":
            y = _ref_conv(p, y, 2, 1)
        else:
            y = _ref_c2f(p, y)
            out.append(y)
    return out


# ----------------------------------------------------------------------------
if __name__ == "__main__":
    key = jax.random.PRNGKey(0)
    k_param, k_x = jax.random.split(key)

    in_channels = 4
    out_channels = [8, 16, 32]
    extractor_depth = 2  # unused by the reference module's __init__ as well

    batch, length = 2, 64
    x = jax.random.normal(k_x, (batch, in_channels, length), jnp.float32)

    params = make_backbone_params(k_param, in_channels, out_channels)
    forward = jax.jit(functools.partial(backbone_forward, params))
    outs = jax.block_until_ready(forward(x))

    # Structure: one tensor per C2F stage.
    assert len(outs) == len(out_channels) - 1
    assert outs[0].shape == (batch, out_channels[1], length // 4)
    assert outs[1].shape == (batch, out_channels[2], length // 8)
    assert all(bool(jnp.all(jnp.isfinite(o.astype(jnp.float32)))) for o in outs)

    # Numerics: compare against an fp32 JAX reference (bf16 activations + approx
    # reciprocal SiLU => loose tolerance).
    ref_outs = _ref_backbone(params, x)
    for o, r in zip(outs, ref_outs):
        err = float(jnp.max(jnp.abs(o.astype(jnp.float32) - r)))
        assert err < 0.2, f"mismatch vs fp32 reference: max|delta|={err}"

    print("KERNEL_OK")
</pallas_src>

<mosaic_0001>
module attributes {stable_mosaic.version = 11 : i64} {
  func.func @kernel(%arg0: i32, %arg1: memref<12x64xbf16, #tpu.memory_space<vmem>>, %arg2: memref<8x12xbf16, #tpu.memory_space<vmem>>, %arg3: memref<8x1xf32, #tpu.memory_space<vmem>>, %arg4: memref<8x64xbf16, #tpu.memory_space<vmem>>) attributes {dimension_semantics = [#tpu.dimension_semantics<parallel>], iteration_bounds = array<i64: 1>, scalar_prefetch = 0 : i64, scratch_operands = 0 : i64, tpu.core_type = #tpu.core_type<tc>, window_params = [{transform_indices = @transform_0, window_bounds = array<i64: 12, 64>}, {pipeline_mode = #tpu.pipeline_mode<synchronous>, transform_indices = @transform_1, window_bounds = array<i64: 8, 12>}, {pipeline_mode = #tpu.pipeline_mode<synchronous>, transform_indices = @transform_2, window_bounds = array<i64: 8, 1>}, {transform_indices = @transform_3, window_bounds = array<i64: 8, 64>}]} {
    %c0 = arith.constant 0 : index
    %c0_0 = arith.constant 0 : index
    %0 = vector.load %arg2[%c0, %c0_0] : memref<8x12xbf16, #tpu.memory_space<vmem>>, vector<8x12xbf16>
    %c0_1 = arith.constant 0 : index
    %c0_2 = arith.constant 0 : index
    %1 = vector.load %arg1[%c0_1, %c0_2] : memref<12x64xbf16, #tpu.memory_space<vmem>>, vector<12x64xbf16>
    %cst = arith.constant dense<0.000000e+00> : vector<8x64xf32>
    %2 = tpu.matmul %0, %1, %cst {dimension_numbers = #tpu.dot_dimension_numbers<[1], [0], [0], [1], [0, 0, 1, 1], [], []>} : vector<8x12xbf16>, vector<12x64xbf16>, vector<8x64xf32> -> vector<8x64xf32>
    %c0_3 = arith.constant 0 : index
    %c0_4 = arith.constant 0 : index
    %3 = vector.load %arg3[%c0_3, %c0_4] : memref<8x1xf32, #tpu.memory_space<vmem>>, vector<8x1xf32>
    %4 = vector.broadcast %3 : vector<8x1xf32> to vector<8x64xf32>
    %5 = arith.addf %2, %4 : vector<8x64xf32>
    %cst_5 = arith.constant 0.000000e+00 : f32
    %6 = vector.broadcast %cst_5 : f32 to vector<8x64xf32>
    %7 = arith.subf %6, %5 : vector<8x64xf32>
    %8 = math.exp %7 : vector<8x64xf32>
    %cst_6 = arith.constant 1.000000e+00 : f32
    %9 = vector.broadcast %cst_6 : f32 to vector<8x64xf32>
    %10 = arith.addf %9, %8 : vector<8x64xf32>
    %11 = tpu.reciprocal %10 {approx = true} : vector<8x64xf32> -> vector<8x64xf32>
    %12 = arith.mulf %5, %11 : vector<8x64xf32>
    %13 = arith.truncf %12 : vector<8x64xf32> to vector<8x64xbf16>
    %c0_7 = arith.constant 0 : index
    %c0_8 = arith.constant 0 : index
    %14 = vector.load %arg4[%c0_7, %c0_8] : memref<8x64xbf16, #tpu.memory_space<vmem>>, vector<8x64xbf16>
    tpu.vector_store %arg4[%c0_7, %c0_8], %13 {strides = array<i32>} : memref<8x64xbf16, #tpu.memory_space<vmem>>, vector<8x64xbf16>,
    return
  }
  func.func @transform_0(%arg0: i32) -> (i32, i32) {
    %c0_i32 = arith.constant 0 : i32
    %c0_i32_0 = arith.constant 0 : i32
    return %c0_i32, %arg0 : i32, i32
  }
  func.func @transform_1(%arg0: i32) -> (i32, i32) {
    %c0_i32 = arith.constant 0 : i32
    %c0_i32_0 = arith.constant 0 : i32
    %c0_i32_1 = arith.constant 0 : i32
    return %c0_i32, %c0_i32_0 : i32, i32
  }
  func.func @transform_2(%arg0: i32) -> (i32, i32) {
    %c0_i32 = arith.constant 0 : i32
    %c0_i32_0 = arith.constant 0 : i32
    %c0_i32_1 = arith.constant 0 : i32
    return %c0_i32, %c0_i32_0 : i32, i32
  }
  func.func @transform_3(%arg0: i32) -> (i32, i32) {
    %c0_i32 = arith.constant 0 : i32
    %c0_i32_0 = arith.constant 0 : i32
    return %c0_i32, %arg0 : i32, i32
  }
}

module attributes {stable_mosaic.version = 11 : i64} {
  func.func @kernel(%arg0: i32, %arg1: memref<16x32xbf16, #tpu.memory_space<vmem>>, %arg2: memref<16x16xbf16, #tpu.memory_space<vmem>>, %arg3: memref<16x1xf32, #tpu.memory_space<vmem>>, %arg4: memref<16x32xbf16, #tpu.memory_space<vmem>>) attributes {dimension_semantics = [#tpu.dimension_semantics<parallel>], iteration_bounds = array<i64: 1>, scalar_prefetch = 0 : i64, scratch_operands = 0 : i64, tpu.core_type = #tpu.core_type<tc>, window_params = [{transform_indices = @transform_0, window_bounds = array<i64: 16, 32>}, {pipeline_mode = #tpu.pipeline_mode<synchronous>, transform_indices = @transform_1, window_bounds = array<i64: 16, 16>}, {pipeline_mode = #tpu.pipeline_mode<synchronous>, transform_indices = @transform_2, window_bounds = array<i64: 16, 1>}, {transform_indices = @transform_3, window_bounds = array<i64: 16, 32>}]} {
    %c0 = arith.constant 0 : index
    %c0_0 = arith.constant 0 : index
    %0 = vector.load %arg1[%c0, %c0_0] : memref<16x32xbf16, #tpu.memory_space<vmem>>, vector<16x32xbf16>
    %1 = arith.extf %0 : vector<16x32xbf16> to vector<16x32xf32>
    %c0_1 = arith.constant 0 : index
    %c0_2 = arith.constant 0 : index
    %2 = vector.load %arg2[%c0_1, %c0_2] : memref<16x16xbf16, #tpu.memory_space<vmem>>, vector<16x16xbf16>
    %cst = arith.constant dense<0.000000e+00> : vector<16x32xf32>
    %3 = tpu.matmul %2, %0, %cst {dimension_numbers = #tpu.dot_dimension_numbers<[1], [0], [0], [1], [0, 0, 1, 1], [], []>} : vector<16x16xbf16>, vector<16x32xbf16>, vector<16x32xf32> -> vector<16x32xf32>
    %c0_3 = arith.constant 0 : index
    %c0_4 = arith.constant 0 : index
    %4 = vector.load %arg3[%c0_3, %c0_4] : memref<16x1xf32, #tpu.memory_space<vmem>>, vector<16x1xf32>
    %5 = vector.broadcast %4 : vector<16x1xf32> to vector<16x32xf32>
    %6 = arith.addf %3, %5 : vector<16x32xf32>
    %cst_5 = arith.constant 0.000000e+00 : f32
    %7 = vector.broadcast %cst_5 : f32 to vector<16x32xf32>
    %8 = arith.subf %7, %6 : vector<16x32xf32>
    %9 = math.exp %8 : vector<16x32xf32>
    %cst_6 = arith.constant 1.000000e+00 : f32
    %10 = vector.broadcast %cst_6 : f32 to vector<16x32xf32>
    %11 = arith.addf %10, %9 : vector<16x32xf32>
    %12 = tpu.reciprocal %11 {approx = true} : vector<16x32xf32> -> vector<16x32xf32>
    %13 = arith.mulf %6, %12 : vector<16x32xf32>
    %14 = arith.addf %13, %1 : vector<16x32xf32>
    %15 = arith.truncf %14 : vector<16x32xf32> to vector<16x32xbf16>
    %c0_7 = arith.constant 0 : index
    %c0_8 = arith.constant 0 : index
    %16 = vector.load %arg4[%c0_7, %c0_8] : memref<16x32xbf16, #tpu.memory_space<vmem>>, vector<16x32xbf16>
    tpu.vector_store %arg4[%c0_7, %c0_8], %15 {strides = array<i32>} : memref<16x32xbf16, #tpu.memory_space<vmem>>, vector<16x32xbf16>,
    return
  }
  func.func @transform_0(%arg0: i32) -> (i32, i32) {
    %c0_i32 = arith.constant 0 : i32
    %c0_i32_0 = arith.constant 0 : i32
    return %c0_i32, %arg0 : i32, i32
  }
  func.func @transform_1(%arg0: i32) -> (i32, i32) {
    %c0_i32 = arith.constant 0 : i32
    %c0_i32_0 = arith.constant 0 : i32
    %c0_i32_1 = arith.constant 0 : i32
    return %c0_i32, %c0_i32_0 : i32, i32
  }
  func.func @transform_2(%arg0: i32) -> (i32, i32) {
    %c0_i32 = arith.constant 0 : i32
    %c0_i32_0 = arith.constant 0 : i32
    %c0_i32_1 = arith.constant 0 : i32
    return %c0_i32, %c0_i32_0 : i32, i32
  }
  func.func @transform_3(%arg0: i32) -> (i32, i32) {
    %c0_i32 = arith.constant 0 : i32
    %c0_i32_0 = arith.constant 0 : i32
    return %c0_i32, %arg0 : i32, i32
  }
}

module attributes {stable_mosaic.version = 11 : i64} {
  func.func @kernel(%arg0: i32, %arg1: memref<24x32xbf16, #tpu.memory_space<vmem>>, %arg2: memref<16x24xbf16, #tpu.memory_space<vmem>>, %arg3: memref<16x1xf32, #tpu.memory_space<vmem>>, %arg4: memref<16x32xbf16, #tpu.memory_space<vmem>>) attributes {dimension_semantics = [#tpu.dimension_semantics<parallel>], iteration_bounds = array<i64: 1>, scalar_prefetch = 0 : i64, scratch_operands = 0 : i64, tpu.core_type = #tpu.core_type<tc>, window_params = [{transform_indices = @transform_0, window_bounds = array<i64: 24, 32>}, {pipeline_mode = #tpu.pipeline_mode<synchronous>, transform_indices = @transform_1, window_bounds = array<i64: 16, 24>}, {pipeline_mode = #tpu.pipeline_mode<synchronous>, transform_indices = @transform_2, window_bounds = array<i64: 16, 1>}, {transform_indices = @transform_3, window_bounds = array<i64: 16, 32>}]} {
    %c0 = arith.constant 0 : index
    %c0_0 = arith.constant 0 : index
    %0 = vector.load %arg2[%c0, %c0_0] : memref<16x24xbf16, #tpu.memory_space<vmem>>, vector<16x24xbf16>
    %c0_1 = arith.constant 0 : index
    %c0_2 = arith.constant 0 : index
    %1 = vector.load %arg1[%c0_1, %c0_2] : memref<24x32xbf16, #tpu.memory_space<vmem>>, vector<24x32xbf16>
    %cst = arith.constant dense<0.000000e+00> : vector<16x32xf32>
    %2 = tpu.matmul %0, %1, %cst {dimension_numbers = #tpu.dot_dimension_numbers<[1], [0], [0], [1], [0, 0, 1, 1], [], []>} : vector<16x24xbf16>, vector<24x32xbf16>, vector<16x32xf32> -> vector<16x32xf32>
    %c0_3 = arith.constant 0 : index
    %c0_4 = arith.constant 0 : index
    %3 = vector.load %arg3[%c0_3, %c0_4] : memref<16x1xf32, #tpu.memory_space<vmem>>, vector<16x1xf32>
    %4 = vector.broadcast %3 : vector<16x1xf32> to vector<16x32xf32>
    %5 = arith.addf %2, %4 : vector<16x32xf32>
    %cst_5 = arith.constant 0.000000e+00 : f32
    %6 = vector.broadcast %cst_5 : f32 to vector<16x32xf32>
    %7 = arith.subf %6, %5 : vector<16x32xf32>
    %8 = math.exp %7 : vector<16x32xf32>
    %cst_6 = arith.constant 1.000000e+00 : f32
    %9 = vector.broadcast %cst_6 : f32 to vector<16x32xf32>
    %10 = arith.addf %9, %8 : vector<16x32xf32>
    %11 = tpu.reciprocal %10 {approx = true} : vector<16x32xf32> -> vector<16x32xf32>
    %12 = arith.mulf %5, %11 : vector<16x32xf32>
    %13 = arith.truncf %12 : vector<16x32xf32> to vector<16x32xbf16>
    %c0_7 = arith.constant 0 : index
    %c0_8 = arith.constant 0 : index
    %14 = vector.load %arg4[%c0_7, %c0_8] : memref<16x32xbf16, #tpu.memory_space<vmem>>, vector<16x32xbf16>
    tpu.vector_store %arg4[%c0_7, %c0_8], %13 {strides = array<i32>} : memref<16x32xbf16, #tpu.memory_space<vmem>>, vector<16x32xbf16>,
    return
  }
  func.func @transform_0(%arg0: i32) -> (i32, i32) {
    %c0_i32 = arith.constant 0 : i32
    %c0_i32_0 = arith.constant 0 : i32
    return %c0_i32, %arg0 : i32, i32
  }
  func.func @transform_1(%arg0: i32) -> (i32, i32) {
    %c0_i32 = arith.constant 0 : i32
    %c0_i32_0 = arith.constant 0 : i32
    %c0_i32_1 = arith.constant 0 : i32
    return %c0_i32, %c0_i32_0 : i32, i32
  }
  func.func @transform_2(%arg0: i32) -> (i32, i32) {
    %c0_i32 = arith.constant 0 : i32
    %c0_i32_0 = arith.constant 0 : i32
    %c0_i32_1 = arith.constant 0 : i32
    return %c0_i32, %c0_i32_0 : i32, i32
  }
  func.func @transform_3(%arg0: i32) -> (i32, i32) {
    %c0_i32 = arith.constant 0 : i32
    %c0_i32_0 = arith.constant 0 : i32
    return %c0_i32, %arg0 : i32, i32
  }
}

module attributes {stable_mosaic.version = 11 : i64} {
  func.func @kernel(%arg0: i32, %arg1: memref<48x16xbf16, #tpu.memory_space<vmem>>, %arg2: memref<32x48xbf16, #tpu.memory_space<vmem>>, %arg3: memref<32x1xf32, #tpu.memory_space<vmem>>, %arg4: memref<32x16xbf16, #tpu.memory_space<vmem>>) attributes {dimension_semantics = [#tpu.dimension_semantics<parallel>], iteration_bounds = array<i64: 1>, scalar_prefetch = 0 : i64, scratch_operands = 0 : i64, tpu.core_type = #tpu.core_type<tc>, window_params = [{transform_indices = @transform_0, window_bounds = array<i64: 48, 16>}, {pipeline_mode = #tpu.pipeline_mode<synchronous>, transform_indices = @transform_1, window_bounds = array<i64: 32, 48>}, {pipeline_mode = #tpu.pipeline_mode<synchronous>, transform_indices = @transform_2, window_bounds = array<i64: 32, 1>}, {transform_indices = @transform_3, window_bounds = array<i64: 32, 16>}]} {
    %c0 = arith.constant 0 : index
    %c0_0 = arith.constant 0 : index
    %0 = vector.load %arg2[%c0, %c0_0] : memref<32x48xbf16, #tpu.memory_space<vmem>>, vector<32x48xbf16>
    %c0_1 = arith.constant 0 : index
    %c0_2 = arith.constant 0 : index
    %1 = vector.load %arg1[%c0_1, %c0_2] : memref<48x16xbf16, #tpu.memory_space<vmem>>, vector<48x16xbf16>
    %cst = arith.constant dense<0.000000e+00> : vector<32x16xf32>
    %2 = tpu.matmul %0, %1, %cst {dimension_numbers = #tpu.dot_dimension_numbers<[1], [0], [0], [1], [0, 0, 1, 1], [], []>} : vector<32x48xbf16>, vector<48x16xbf16>, vector<32x16xf32> -> vector<32x16xf32>
    %c0_3 = arith.constant 0 : index
    %c0_4 = arith.constant 0 : index
    %3 = vector.load %arg3[%c0_3, %c0_4] : memref<32x1xf32, #tpu.memory_space<vmem>>, vector<32x1xf32>
    %4 = vector.broadcast %3 : vector<32x1xf32> to vector<32x16xf32>
    %5 = arith.addf %2, %4 : vector<32x16xf32>
    %cst_5 = arith.constant 0.000000e+00 : f32
    %6 = vector.broadcast %cst_5 : f32 to vector<32x16xf32>
    %7 = arith.subf %6, %5 : vector<32x16xf32>
    %8 = math.exp %7 : vector<32x16xf32>
    %cst_6 = arith.constant 1.000000e+00 : f32
    %9 = vector.broadcast %cst_6 : f32 to vector<32x16xf32>
    %10 = arith.addf %9, %8 : vector<32x16xf32>
    %11 = tpu.reciprocal %10 {approx = true} : vector<32x16xf32> -> vector<32x16xf32>
    %12 = arith.mulf %5, %11 : vector<32x16xf32>
    %13 = arith.truncf %12 : vector<32x16xf32> to vector<32x16xbf16>
    %c0_7 = arith.constant 0 : index
    %c0_8 = arith.constant 0 : index
    %14 = vector.load %arg4[%c0_7, %c0_8] : memref<32x16xbf16, #tpu.memory_space<vmem>>, vector<32x16xbf16>
    tpu.vector_store %arg4[%c0_7, %c0_8], %13 {strides = array<i32>} : memref<32x16xbf16, #tpu.memory_space<vmem>>, vector<32x16xbf16>,
    return
  }
  func.func @transform_0(%arg0: i32) -> (i32, i32) {
    %c0_i32 = arith.constant 0 : i32
    %c0_i32_0 = arith.constant 0 : i32
    return %c0_i32, %arg0 : i32, i32
  }
  func.func @transform_1(%arg0: i32) -> (i32, i32) {
    %c0_i32 = arith.constant 0 : i32
    %c0_i32_0 = arith.constant 0 : i32
    %c0_i32_1 = arith.constant 0 : i32
    return %c0_i32, %c0_i32_0 : i32, i32
  }
  func.func @transform_2(%arg0: i32) -> (i32, i32) {
    %c0_i32 = arith.constant 0 : i32
    %c0_i32_0 = arith.constant 0 : i32
    %c0_i32_1 = arith.constant 0 : i32
    return %c0_i32, %c0_i32_0 : i32, i32
  }
  func.func @transform_3(%arg0: i32) -> (i32, i32) {
    %c0_i32 = arith.constant 0 : i32
    %c0_i32_0 = arith.constant 0 : i32
    return %c0_i32, %arg0 : i32, i32
  }
}

module attributes {stable_mosaic.version = 11 : i64} {
  func.func @kernel(%arg0: i32, %arg1: memref<32x16xbf16, #tpu.memory_space<vmem>>, %arg2: memref<32x32xbf16, #tpu.memory_space<vmem>>, %arg3: memref<32x1xf32, #tpu.memory_space<vmem>>, %arg4: memref<8x16xbf16, #tpu.memory_space<vmem>>, %arg5: memref<8x1xf32, #tpu.memory_space<vmem>>, %arg6: memref<16x8xbf16, #tpu.memory_space<vmem>>, %arg7: memref<16x1xf32, #tpu.memory_space<vmem>>, %arg8: memref<32x16xbf16, #tpu.memory_space<vmem>>) attributes {dimension_semantics = [#tpu.dimension_semantics<parallel>], iteration_bounds = array<i64: 1>, scalar_prefetch = 0 : i64, scratch_operands = 0 : i64, tpu.core_type = #tpu.core_type<tc>, window_params = [{transform_indices = @transform_0, window_bounds = array<i64: 32, 16>}, {pipeline_mode = #tpu.pipeline_mode<synchronous>, transform_indices = @transform_1, window_bounds = array<i64: 32, 32>}, {pipeline_mode = #tpu.pipeline_mode<synchronous>, transform_indices = @transform_2, window_bounds = array<i64: 32, 1>}, {pipeline_mode = #tpu.pipeline_mode<synchronous>, transform_indices = @transform_3, window_bounds = array<i64: 8, 16>}, {pipeline_mode = #tpu.pipeline_mode<synchronous>, transform_indices = @transform_4, window_bounds = array<i64: 8, 1>}, {pipeline_mode = #tpu.pipeline_mode<synchronous>, transform_indices = @transform_5, window_bounds = array<i64: 16, 8>}, {pipeline_mode = #tpu.pipeline_mode<synchronous>, transform_indices = @transform_6, window_bounds = array<i64: 16, 1>}, {transform_indices = @transform_7, window_bounds = array<i64: 32, 16>}]} {
    %c0 = arith.constant 0 : index
    %c0_0 = arith.constant 0 : index
    %0 = vector.load %arg1[%c0, %c0_0] : memref<32x16xbf16, #tpu.memory_space<vmem>>, vector<32x16xbf16>
    %1 = arith.extf %0 : vector<32x16xbf16> to vector<32x16xf32>
    %c0_1 = arith.constant 0 : index
    %c0_2 = arith.constant 0 : index
    %2 = vector.load %arg2[%c0_1, %c0_2] : memref<32x32xbf16, #tpu.memory_space<vmem>>, vector<32x32xbf16>
    %cst = arith.constant dense<0.000000e+00> : vector<32x16xf32>
    %3 = tpu.matmul %2, %0, %cst {dimension_numbers = #tpu.dot_dimension_numbers<[1], [0], [0], [1], [0, 0, 1, 1], [], []>} : vector<32x32xbf16>, vector<32x16xbf16>, vector<32x16xf32> -> vector<32x16xf32>
    %c0_3 = arith.constant 0 : index
    %c0_4 = arith.constant 0 : index
    %4 = vector.load %arg3[%c0_3, %c0_4] : memref<32x1xf32, #tpu.memory_space<vmem>>, vector<32x1xf32>
    %5 = vector.broadcast %4 : vector<32x1xf32> to vector<32x16xf32>
    %6 = arith.addf %3, %5 : vector<32x16xf32>
    %cst_5 = arith.constant 0.000000e+00 : f32
    %7 = vector.broadcast %cst_5 : f32 to vector<32x16xf32>
    %8 = arith.subf %7, %6 : vector<32x16xf32>
    %9 = math.exp %8 : vector<32x16xf32>
    %cst_6 = arith.constant 1.000000e+00 : f32
    %10 = vector.broadcast %cst_6 : f32 to vector<32x16xf32>
    %11 = arith.addf %10, %9 : vector<32x16xf32>
    %12 = tpu.reciprocal %11 {approx = true} : vector<32x16xf32> -> vector<32x16xf32>
    %13 = arith.mulf %6, %12 : vector<32x16xf32>
    %14 = vector.extract_strided_slice %13 {offsets = [0, 0], sizes = [16, 16], strides = [1, 1]} : vector<32x16xf32> to vector<16x16xf32>
    %15 = vector.extract_strided_slice %1 {offsets = [0, 0], sizes = [16, 16], strides = [1, 1]} : vector<32x16xf32> to vector<16x16xf32>
    %16 = arith.addf %14, %15 : vector<16x16xf32>
    %17 = arith.truncf %16 : vector<16x16xf32> to vector<16x16xbf16>
    %c0_7 = arith.constant 0 : index
    %c0_8 = arith.constant 0 : index
    %18 = vector.load %arg8[%c0_7, %c0_8] : memref<32x16xbf16, #tpu.memory_space<vmem>>, vector<16x16xbf16>
    tpu.vector_store %arg8[%c0_7, %c0_8], %17 {strides = array<i32>} : memref<32x16xbf16, #tpu.memory_space<vmem>>, vector<16x16xbf16>,
    %19 = vector.extract_strided_slice %13 {offsets = [16, 0], sizes = [16, 16], strides = [1, 1]} : vector<32x16xf32> to vector<16x16xf32>
    %c0_9 = arith.constant 0 : index
    %c0_10 = arith.constant 0 : index
    %20 = vector.load %arg4[%c0_9, %c0_10] : memref<8x16xbf16, #tpu.memory_space<vmem>>, vector<8x16xbf16>
    %21 = arith.truncf %19 : vector<16x16xf32> to vector<16x16xbf16>
    %cst_11 = arith.constant dense<0.000000e+00> : vector<8x16xf32>
    %22 = tpu.matmul %20, %21, %cst_11 {dimension_numbers = #tpu.dot_dimension_numbers<[1], [0], [0], [1], [0, 0, 1, 1], [], []>} : vector<8x16xbf16>, vector<16x16xbf16>, vector<8x16xf32> -> vector<8x16xf32>
    %c0_12 = arith.constant 0 : index
    %c0_13 = arith.constant 0 : index
    %23 = vector.load %arg5[%c0_12, %c0_13] : memref<8x1xf32, #tpu.memory_space<vmem>>, vector<8x1xf32>
    %24 = vector.broadcast %23 : vector<8x1xf32> to vector<8x16xf32>
    %25 = arith.addf %22, %24 : vector<8x16xf32>
    %cst_14 = arith.constant 0.000000e+00 : f32
    %26 = vector.broadcast %cst_14 : f32 to vector<8x16xf32>
    %27 = arith.subf %26, %25 : vector<8x16xf32>
    %28 = math.exp %27 : vector<8x16xf32>
    %cst_15 = arith.constant 1.000000e+00 : f32
    %29 = vector.broadcast %cst_15 : f32 to vector<8x16xf32>
    %30 = arith.addf %29, %28 : vector<8x16xf32>
    %31 = tpu.reciprocal %30 {approx = true} : vector<8x16xf32> -> vector<8x16xf32>
    %32 = arith.mulf %25, %31 : vector<8x16xf32>
    %c0_16 = arith.constant 0 : index
    %c0_17 = arith.constant 0 : index
    %33 = vector.load %arg6[%c0_16, %c0_17] : memref<16x8xbf16, #tpu.memory_space<vmem>>, vector<16x8xbf16>
    %34 = arith.truncf %32 : vector<8x16xf32> to vector<8x16xbf16>
    %cst_18 = arith.constant dense<0.000000e+00> : vector<16x16xf32>
    %35 = tpu.matmul %33, %34, %cst_18 {dimension_numbers = #tpu.dot_dimension_numbers<[1], [0], [0], [1], [0, 0, 1, 1], [], []>} : vector<16x8xbf16>, vector<8x16xbf16>, vector<16x16xf32> -> vector<16x16xf32>
    %c0_19 = arith.constant 0 : index
    %c0_20 = arith.constant 0 : index
    %36 = vector.load %arg7[%c0_19, %c0_20] : memref<16x1xf32, #tpu.memory_space<vmem>>, vector<16x1xf32>
    %37 = vector.broadcast %36 : vector<16x1xf32> to vector<16x16xf32>
    %38 = arith.addf %35, %37 : vector<16x16xf32>
    %cst_21 = arith.constant 0.000000e+00 : f32
    %39 = vector.broadcast %cst_21 : f32 to vector<16x16xf32>
    %40 = arith.subf %39, %38 : vector<16x16xf32>
    %41 = math.exp %40 : vector<16x16xf32>
    %cst_22 = arith.constant 1.000000e+00 : f32
    %42 = vector.broadcast %cst_22 : f32 to vector<16x16xf32>
    %43 = arith.addf %42, %41 : vector<16x16xf32>
    %44 = tpu.reciprocal %43 {approx = true} : vector<16x16xf32> -> vector<16x16xf32>
    %45 = arith.mulf %38, %44 : vector<16x16xf32>
    %46 = arith.addf %45, %19 : vector<16x16xf32>
    %47 = vector.extract_strided_slice %1 {offsets = [16, 0], sizes = [16, 16], strides = [1, 1]} : vector<32x16xf32> to vector<16x16xf32>
    %48 = arith.addf %46, %47 : vector<16x16xf32>
    %49 = arith.truncf %48 : vector<16x16xf32> to vector<16x16xbf16>
    %c16 = arith.constant 16 : index
    %c0_23 = arith.constant 0 : index
    %50 = vector.load %arg8[%c16, %c0_23] : memref<32x16xbf16, #tpu.memory_space<vmem>>, vector<16x16xbf16>
    tpu.vector_store %arg8[%c16, %c0_23], %49 {strides = array<i32>} : memref<32x16xbf16, #tpu.memory_space<vmem>>, vector<16x16xbf16>,
    return
  }
  func.func @transform_0(%arg0: i32) -> (i32, i32) {
    %c0_i32 = arith.constant 0 : i32
    %c0_i32_0 = arith.constant 0 : i32
    return %c0_i32, %arg0 : i32, i32
  }
  func.func @transform_1(%arg0: i32) -> (i32, i32) {
    %c0_i32 = arith.constant 0 : i32
    %c0_i32_0 = arith.constant 0 : i32
    %c0_i32_1 = arith.constant 0 : i32
    return %c0_i32, %c0_i32_0 : i32, i32
  }
  func.func @transform_2(%arg0: i32) -> (i32, i32) {
    %c0_i32 = arith.constant 0 : i32
    %c0_i32_0 = arith.constant 0 : i32
    %c0_i32_1 = arith.constant 0 : i32
    return %c0_i32, %c0_i32_0 : i32, i32
  }
  func.func @transform_3(%arg0: i32) -> (i32, i32) {
    %c0_i32 = arith.constant 0 : i32
    %c0_i32_0 = arith.constant 0 : i32
    %c0_i32_1 = arith.constant 0 : i32
    return %c0_i32, %c0_i32_0 : i32, i32
  }
  func.func @transform_4(%arg0: i32) -> (i32, i32) {
    %c0_i32 = arith.constant 0 : i32
    %c0_i32_0 = arith.constant 0 : i32
    %c0_i32_1 = arith.constant 0 : i32
    return %c0_i32, %c0_i32_0 : i32, i32
  }
  func.func @transform_5(%arg0: i32) -> (i32, i32) {
    %c0_i32 = arith.constant 0 : i32
    %c0_i32_0 = arith.constant 0 : i32
    %c0_i32_1 = arith.constant 0 : i32
    return %c0_i32, %c0_i32_0 : i32, i32
  }
  func.func @transform_6(%arg0: i32) -> (i32, i32) {
    %c0_i32 = arith.constant 0 : i32
    %c0_i32_0 = arith.constant 0 : i32
    %c0_i32_1 = arith.constant 0 : i32
    return %c0_i32, %c0_i32_0 : i32, i32
  }
  func.func @transform_7(%arg0: i32) -> (i32, i32) {
    %c0_i32 = arith.constant 0 : i32
    %c0_i32_0 = arith.constant 0 : i32
    return %c0_i32, %arg0 : i32, i32
  }
}

</mosaic_0001>

<llo_original>
// kernel: backbone_forward.5
$region0: #{backbone_forward.5}
  #allocation0 [shape = 'u32[]', space=smem, size = 0x4, offset = 0x4, fixed_abs, tag = 'smem constant byte address 0x4 - core index']
  #allocation1 [shape = 'u32[144,128]{1,0:T(1,128)}', space=vmem, size = 0x12000, scoped, tag = 'internal scratch']
  %s0 = inlined_call_operand.vmem [shape: bf16[12,64], index: 0, kind: input, shape index: {}]
  %s1 = inlined_call_operand.vmem [shape: bf16[8,12], index: 1, kind: input, shape index: {}]
  %s2 = inlined_call_operand.vmem [shape: f32[8,1], index: 2, kind: input, shape index: {}]
  %s3 = inlined_call_operand.vmem [shape: bf16[8,64], index: 3, kind: output, shape index: {}]
  %s4 = sld [smem:[#allocation0]]
  $region22: #{backbone_forward.5} parent=0
    _
  %s6 = ssub.s32 1, %s4
  %s7 = scalar_select 0, %s6, %s4
  // Predicated region
  $region2: #{backbone_forward.5} parent=0 // pred_check
    _
  $region3: #{backbone_forward.5} parent=0 // pred_check_branch
    %9 = sbr.rel (0) target = $region5
  $region4: #{backbone_forward.5} parent=0 // pred_region
    _
  $region5: #{backbone_forward.5} parent=0 // pred_fallthru
    _
  // Predicated region
  $region6: #{backbone_forward.5} parent=0 // pred_check
    _
  $region7: #{backbone_forward.5} parent=0 // pred_check_branch
    %11 = sbr.rel (0) target = $region9
  $region8: #{backbone_forward.5} parent=0 // pred_region
    _
  $region9: #{backbone_forward.5} parent=0 // pred_fallthru
    _
  // Predicated region
  $region10: #{backbone_forward.5} parent=0 // pred_check
    _
  $region11: #{backbone_forward.5} parent=0 // pred_check_branch
    %13 = sbr.rel (0) target = $region13
  $region12: #{backbone_forward.5} parent=0 // pred_region
    _
  $region13: #{backbone_forward.5} parent=0 // pred_fallthru
    _
  %v15 = vld [vmem:[%s1] sm:$0xf]
  %v16 = vld [vmem:[%s0] sm:$0xf]
  %v17 = vld [vmem:[%s0 + $0x4] sm:$0x3]
  %v18 = vld [vmem:[%s2] sm:$0xff]
  %20 = vset.pattern.permute.xlu0 0
  %21 = vperm.xlu0 %20, %v18
  %v22 = vpop.permute.xlu0 %21
  %v26 = vunpack.c.l.b16 %v16
  %v27 = vunpack.c.l.b16 %v17
  %v28 = vpack.c.b16 %v27, %v26
  %vm29 = vcmask 97280
  %v31 = vsel %vm29, %v15, 0
  %vm33 = vcmask 1045504
  %v35 = vsel %vm33, %v28, 0
  %37 = vmatprep.subr.bf16.mxu0 0
  %38 = vmatpush1.bf16.msra.mxu0 %v35
  %39 = vmatprep.subr.bf16.mxu0 0
  %40 = vmatpush1.bf16.msra.mxu0 0
  %41 = vmatprep.subr.bf16.mxu0 0
  %42 = vmatpush1.bf16.msra.mxu0 0
  %43 = vmatprep.subr.bf16.mxu0 0
  %44 = vmatpush1.bf16.msra.mxu0 0
  %45 = vmatprep.subr.bf16.mxu0 0
  %46 = vmatpush1.bf16.msra.mxu0 0
  %47 = vmatprep.subr.bf16.mxu0 0
  %48 = vmatpush1.bf16.msra.mxu0 0
  %49 = vmatprep.subr.bf16.mxu0 0
  %50 = vmatpush1.bf16.msra.mxu0 0
  %51 = vmatprep.subr.bf16.mxu0 0
  %52 = vmatpush1.bf16.msra.mxu0 0
  %53 = vmatprep.subr.bf16.mxu0 0
  %54 = vmatpush1.bf16.msra.mxu0 0
  %55 = vmatprep.subr.bf16.mxu0 0
  %56 = vmatpush1.bf16.msra.mxu0 0
  %57 = vmatprep.subr.bf16.mxu0 0
  %58 = vmatpush1.bf16.msra.mxu0 0
  %59 = vmatprep.subr.bf16.mxu0 0
  %60 = vmatpush1.bf16.msra.mxu0 0
  %61 = vmatprep.subr.bf16.mxu0 0
  %62 = vmatpush1.bf16.msra.mxu0 0
  %63 = vmatprep.subr.bf16.mxu0 0
  %64 = vmatpush1.bf16.msra.mxu0 0
  %65 = vmatprep.subr.bf16.mxu0 0
  %66 = vmatpush1.bf16.msra.mxu0 0
  %67 = vmatprep.subr.bf16.mxu0 0
  %68 = vmatpush1.bf16.msra.mxu0 0
  %69 = vmatprep.mubr.bf16.mxu0 0
  %70 = vmatmul.mubr.bf16.gmra.mrb[0].mxu0 %v31
  %v71 = vpop.f32.mrb[0].mxu0
  %v72 = vadd.f32 %v22, %v71
  %v73 = vpop.f32.mrb[0].mxu0
  %v74 = vpop.f32.mrb[0].mxu0
  %v75 = vpop.f32.mrb[0].mxu0
  %76 = vdwg.mxu0
  %v77 = vsub.f32 0.0, %v72
  %v78 = vmul.f32 %v77, 1.442695
  %v79 = vpow.pop %v78
  %v80 = vadd.f32 %v79, 1.0
  %v81 = vrcp.pop %v80
  %v82 = vmul.f32 %v72, %v81
  %v83 = vpack.c.bf16 %v82, %v82
  %vm84 = vcmask 519168
  %85 = vst.msk [vmem:[%s3] sm:$0xf] %vm84, %v83
  // Predicated region
  $region14: #{backbone_forward.5} parent=0 // pred_check
    _
  $region15: #{backbone_forward.5} parent=0 // pred_check_branch
    %87 = sbr.rel (0) target = $region17
  $region16: #{backbone_forward.5} parent=0 // pred_region
    _
  $region17: #{backbone_forward.5} parent=0 // pred_fallthru
    _
  // Predicated region
  $region18: #{backbone_forward.5} parent=0 // pred_check
    _
  $region19: #{backbone_forward.5} parent=0 // pred_check_branch
    %89 = sbr.rel (0) target = $region21
  $region20: #{backbone_forward.5} parent=0 // pred_region
    _
  $region21: #{backbone_forward.5} parent=0 // pred_fallthru
    _

// kernel: backbone_forward.7
$region0: #{backbone_forward.7}
  #allocation0 [shape = 'u32[]', space=smem, size = 0x4, offset = 0x4, fixed_abs, tag = 'smem constant byte address 0x4 - core index']
  #allocation1 [shape = 'u32[144,128]{1,0:T(1,128)}', space=vmem, size = 0x12000, scoped, tag = 'internal scratch']
  %s0 = inlined_call_operand.vmem [shape: bf16[16,32], index: 0, kind: input, shape index: {}]
  %s1 = inlined_call_operand.vmem [shape: bf16[16,16], index: 1, kind: input, shape index: {}]
  %s2 = inlined_call_operand.vmem [shape: f32[16,1], index: 2, kind: input, shape index: {}]
  %s3 = inlined_call_operand.vmem [shape: bf16[16,32], index: 3, kind: output, shape index: {}]
  %s4 = sld [smem:[#allocation0]]
  $region22: #{backbone_forward.7} parent=0
    _
  %s6 = ssub.s32 1, %s4
  %s7 = scalar_select 0, %s6, %s4
  // Predicated region
  $region2: #{backbone_forward.7} parent=0 // pred_check
    _
  $region3: #{backbone_forward.7} parent=0 // pred_check_branch
    %9 = sbr.rel (0) target = $region5
  $region4: #{backbone_forward.7} parent=0 // pred_region
    _
  $region5: #{backbone_forward.7} parent=0 // pred_fallthru
    _
  // Predicated region
  $region6: #{backbone_forward.7} parent=0 // pred_check
    _
  $region7: #{backbone_forward.7} parent=0 // pred_check_branch
    %11 = sbr.rel (0) target = $region9
  $region8: #{backbone_forward.7} parent=0 // pred_region
    _
  $region9: #{backbone_forward.7} parent=0 // pred_fallthru
    _
  // Predicated region
  $region10: #{backbone_forward.7} parent=0 // pred_check
    _
  $region11: #{backbone_forward.7} parent=0 // pred_check_branch
    %13 = sbr.rel (0) target = $region13
  $region12: #{backbone_forward.7} parent=0 // pred_region
    _
  $region13: #{backbone_forward.7} parent=0 // pred_fallthru
    _
  %v15 = vld [vmem:[%s0] sm:$0xf]
  %v16 = vld [vmem:[%s0 + $0x4] sm:$0xf]
  %v17 = vunpack.c.l.bf16 %v15
  %v18 = vunpack.c.l.bf16 %v16
  %v19 = vld [vmem:[%s1] sm:$0xf]
  %v20 = vld [vmem:[%s1 + $0x4] sm:$0xf]
  %v21 = vld [vmem:[%s2] sm:$0xff]
  %v22 = vld [vmem:[%s2 + $0x8] sm:$0xff]
  %24 = vset.pattern.permute.xlu0 0
  %25 = vperm.xlu0 %24, %v21
  %v26 = vpop.permute.xlu0 %25
  %29 = vset.pattern.permute.xlu0 0
  %30 = vperm.xlu0 %29, %v22
  %v31 = vpop.permute.xlu0 %30
  %v35 = vunpack.c.l.b16 %v19
  %v36 = vunpack.c.l.b16 %v20
  %v37 = vpack.c.b16 %v36, %v35
  %v40 = vunpack.c.l.b16 %v15
  %v41 = vunpack.c.l.b16 %v16
  %v42 = vpack.c.b16 %v41, %v40
  %vm44 = vcmask 130048
  %v46 = vsel %vm44, %v37, 0
  %48 = vmatprep.subr.bf16.mxu0 0
  %49 = vmatpush1.bf16.msra.mxu0 %v42
  %50 = vmatprep.subr.bf16.mxu0 0
  %51 = vmatpush1.bf16.msra.mxu0 0
  %52 = vmatprep.subr.bf16.mxu0 0
  %53 = vmatpush1.bf16.msra.mxu0 0
  %54 = vmatprep.subr.bf16.mxu0 0
  %55 = vmatpush1.bf16.msra.mxu0 0
  %56 = vmatprep.subr.bf16.mxu0 0
  %57 = vmatpush1.bf16.msra.mxu0 0
  %58 = vmatprep.subr.bf16.mxu0 0
  %59 = vmatpush1.bf16.msra.mxu0 0
  %60 = vmatprep.subr.bf16.mxu0 0
  %61 = vmatpush1.bf16.msra.mxu0 0
  %62 = vmatprep.subr.bf16.mxu0 0
  %63 = vmatpush1.bf16.msra.mxu0 0
  %64 = vmatprep.subr.bf16.mxu0 0
  %65 = vmatpush1.bf16.msra.mxu0 0
  %66 = vmatprep.subr.bf16.mxu0 0
  %67 = vmatpush1.bf16.msra.mxu0 0
  %68 = vmatprep.subr.bf16.mxu0 0
  %69 = vmatpush1.bf16.msra.mxu0 0
  %70 = vmatprep.subr.bf16.mxu0 0
  %71 = vmatpush1.bf16.msra.mxu0 0
  %72 = vmatprep.subr.bf16.mxu0 0
  %73 = vmatpush1.bf16.msra.mxu0 0
  %74 = vmatprep.subr.bf16.mxu0 0
  %75 = vmatpush1.bf16.msra.mxu0 0
  %76 = vmatprep.subr.bf16.mxu0 0
  %77 = vmatpush1.bf16.msra.mxu0 0
  %78 = vmatprep.subr.bf16.mxu0 0
  %79 = vmatpush1.bf16.msra.mxu0 0
  %80 = vmatprep.mubr.bf16.mxu0 0
  %81 = vmatmul.mubr.bf16.gmra.mrb[0].mxu0 %v46
  %v82 = vpop.f32.mrb[0].mxu0
  %v83 = vadd.f32 %v26, %v82
  %v84 = vpop.f32.mrb[0].mxu0
  %v85 = vpop.f32.mrb[0].mxu0
  %v86 = vadd.f32 %v31, %v85
  %v87 = vpop.f32.mrb[0].mxu0
  %88 = vdwg.mxu0
  %v89 = vsub.f32 0.0, %v83
  %v90 = vsub.f32 0.0, %v86
  %v91 = vmul.f32 %v89, 1.442695
  %v92 = vpow.pop %v91
  %v93 = vmul.f32 %v90, 1.442695
  %v94 = vpow.pop %v93
  %v95 = vadd.f32 %v92, 1.0
  %v96 = vadd.f32 %v94, 1.0
  %v97 = vrcp.pop %v95
  %v98 = vrcp.pop %v96
  %v99 = vmul.f32 %v83, %v97
  %v100 = vmul.f32 %v86, %v98
  %v101 = vadd.f32 %v99, %v17
  %v102 = vadd.f32 %v100, %v18
  %v103 = vpack.c.bf16 %v102, %v101
  %v105 = vunpack.c.l.b16 %v103
  %v106 = vunpack.c.h.b16 %v103
  %v107 = vpack.c.b16 %v105, %v105
  %v108 = vpack.c.b16 %v106, %v106
  %vm111 = vcmask 257024
  %112 = vst.msk [vmem:[%s3] sm:$0xf] %vm111, %v107
  %113 = vst.msk [vmem:[%s3 + $0x4] sm:$0xf] %vm111, %v108
  // Predicated region
  $region14: #{backbone_forward.7} parent=0 // pred_check
    _
  $region15: #{backbone_forward.7} parent=0 // pred_check_branch
    %115 = sbr.rel (0) target = $region17
  $region16: #{backbone_forward.7} parent=0 // pred_region
    _
  $region17: #{backbone_forward.7} parent=0 // pred_fallthru
    _
  // Predicated region
  $region18: #{backbone_forward.7} parent=0 // pred_check
    _
  $region19: #{backbone_forward.7} parent=0 // pred_check_branch
    %117 = sbr.rel (0) target = $region21
  $region20: #{backbone_forward.7} parent=0 // pred_region
    _
  $region21: #{backbone_forward.7} parent=0 // pred_fallthru
    _

// kernel: backbone_forward.6
$region0: #{backbone_forward.6}
  #allocation0 [shape = 'u32[]', space=smem, size = 0x4, offset = 0x4, fixed_abs, tag = 'smem constant byte address 0x4 - core index']
  #allocation1 [shape = 'u32[144,128]{1,0:T(1,128)}', space=vmem, size = 0x12000, scoped, tag = 'internal scratch']
  %s0 = inlined_call_operand.vmem [shape: bf16[24,32], index: 0, kind: input, shape index: {}]
  %s1 = inlined_call_operand.vmem [shape: bf16[16,24], index: 1, kind: input, shape index: {}]
  %s2 = inlined_call_operand.vmem [shape: f32[16,1], index: 2, kind: input, shape index: {}]
  %s3 = inlined_call_operand.vmem [shape: bf16[16,32], index: 3, kind: output, shape index: {}]
  %s4 = sld [smem:[#allocation0]]
  $region22: #{backbone_forward.6} parent=0
    _
  %s6 = ssub.s32 1, %s4
  %s7 = scalar_select 0, %s6, %s4
  // Predicated region
  $region2: #{backbone_forward.6} parent=0 // pred_check
    _
  $region3: #{backbone_forward.6} parent=0 // pred_check_branch
    %9 = sbr.rel (0) target = $region5
  $region4: #{backbone_forward.6} parent=0 // pred_region
    _
  $region5: #{backbone_forward.6} parent=0 // pred_fallthru
    _
  // Predicated region
  $region6: #{backbone_forward.6} parent=0 // pred_check
    _
  $region7: #{backbone_forward.6} parent=0 // pred_check_branch
    %11 = sbr.rel (0) target = $region9
  $region8: #{backbone_forward.6} parent=0 // pred_region
    _
  $region9: #{backbone_forward.6} parent=0 // pred_fallthru
    _
  // Predicated region
  $region10: #{backbone_forward.6} parent=0 // pred_check
    _
  $region11: #{backbone_forward.6} parent=0 // pred_check_branch
    %13 = sbr.rel (0) target = $region13
  $region12: #{backbone_forward.6} parent=0 // pred_region
    _
  $region13: #{backbone_forward.6} parent=0 // pred_fallthru
    _
  %v15 = vld [vmem:[%s1] sm:$0xf]
  %v16 = vld [vmem:[%s1 + $0x4] sm:$0xf]
  %v17 = vld [vmem:[%s0] sm:$0xf]
  %v18 = vld [vmem:[%s0 + $0x4] sm:$0xf]
  %v19 = vld [vmem:[%s0 + $0x8] sm:$0xf]
  %v20 = vld [vmem:[%s2] sm:$0xff]
  %v21 = vld [vmem:[%s2 + $0x8] sm:$0xff]
  %23 = vset.pattern.permute.xlu0 0
  %24 = vperm.xlu0 %23, %v20
  %v25 = vpop.permute.xlu0 %24
  %28 = vset.pattern.permute.xlu0 0
  %29 = vperm.xlu0 %28, %v21
  %v30 = vpop.permute.xlu0 %29
  %v34 = vunpack.c.l.b16 %v15
  %v35 = vunpack.c.l.b16 %v16
  %v36 = vpack.c.b16 %v35, %v34
  %v40 = vunpack.c.l.b16 %v17
  %v41 = vunpack.c.l.b16 %v18
  %v42 = vunpack.c.l.b16 %v19
  %v43 = vpack.c.b16 %v41, %v40
  %v44 = vpack.c.b16 %v42, %v42
  %vm46 = vcmask 195584
  %v48 = vsel %vm46, %v36, 0
  %vm50 = vcmask 1043456
  %v52 = vsel %vm50, %v44, 0
  %54 = vmatprep.subr.bf16.mxu0 0
  %55 = vmatpush1.bf16.msra.mxu0 %v43
  %56 = vmatprep.subr.bf16.mxu0 0
  %57 = vmatpush1.bf16.msra.mxu0 %v52
  %58 = vmatprep.subr.bf16.mxu0 0
  %59 = vmatpush1.bf16.msra.mxu0 0
  %60 = vmatprep.subr.bf16.mxu0 0
  %61 = vmatpush1.bf16.msra.mxu0 0
  %62 = vmatprep.subr.bf16.mxu0 0
  %63 = vmatpush1.bf16.msra.mxu0 0
  %64 = vmatprep.subr.bf16.mxu0 0
  %65 = vmatpush1.bf16.msra.mxu0 0
  %66 = vmatprep.subr.bf16.mxu0 0
  %67 = vmatpush1.bf16.msra.mxu0 0
  %68 = vmatprep.subr.bf16.mxu0 0
  %69 = vmatpush1.bf16.msra.mxu0 0
  %70 = vmatprep.subr.bf16.mxu0 0
  %71 = vmatpush1.bf16.msra.mxu0 0
  %72 = vmatprep.subr.bf16.mxu0 0
  %73 = vmatpush1.bf16.msra.mxu0 0
  %74 = vmatprep.subr.bf16.mxu0 0
  %75 = vmatpush1.bf16.msra.mxu0 0
  %76 = vmatprep.subr.bf16.mxu0 0
  %77 = vmatpush1.bf16.msra.mxu0 0
  %78 = vmatprep.subr.bf16.mxu0 0
  %79 = vmatpush1.bf16.msra.mxu0 0
  %80 = vmatprep.subr.bf16.mxu0 0
  %81 = vmatpush1.bf16.msra.mxu0 0
  %82 = vmatprep.subr.bf16.mxu0 0
  %83 = vmatpush1.bf16.msra.mxu0 0
  %84 = vmatprep.subr.bf16.mxu0 0
  %85 = vmatpush1.bf16.msra.mxu0 0
  %86 = vmatprep.mubr.bf16.mxu0 0
  %87 = vmatmul.mubr.bf16.gmra.mrb[0].mxu0 %v48
  %v88 = vpop.f32.mrb[0].mxu0
  %v89 = vadd.f32 %v25, %v88
  %v90 = vpop.f32.mrb[0].mxu0
  %v91 = vpop.f32.mrb[0].mxu0
  %v92 = vadd.f32 %v30, %v91
  %v93 = vpop.f32.mrb[0].mxu0
  %94 = vdwg.mxu0
  %v95 = vsub.f32 0.0, %v89
  %v96 = vsub.f32 0.0, %v92
  %v97 = vmul.f32 %v95, 1.442695
  %v98 = vpow.pop %v97
  %v99 = vmul.f32 %v96, 1.442695
  %v100 = vpow.pop %v99
  %v101 = vadd.f32 %v98, 1.0
  %v102 = vadd.f32 %v100, 1.0
  %v103 = vrcp.pop %v101
  %v104 = vrcp.pop %v102
  %v105 = vmul.f32 %v89, %v103
  %v106 = vmul.f32 %v92, %v104
  %v107 = vpack.c.bf16 %v106, %v105
  %v109 = vunpack.c.l.b16 %v107
  %v110 = vunpack.c.h.b16 %v107
  %v111 = vpack.c.b16 %v109, %v109
  %v112 = vpack.c.b16 %v110, %v110
  %vm115 = vcmask 257024
  %116 = vst.msk [vmem:[%s3] sm:$0xf] %vm115, %v111
  %117 = vst.msk [vmem:[%s3 + $0x4] sm:$0xf] %vm115, %v112
  // Predicated region
  $region14: #{backbone_forward.6} parent=0 // pred_check
    _
  $region15: #{backbone_forward.6} parent=0 // pred_check_branch
    %119 = sbr.rel (0) target = $region17
  $region16: #{backbone_forward.6} parent=0 // pred_region
    _
  $region17: #{backbone_forward.6} parent=0 // pred_fallthru
    _
  // Predicated region
  $region18: #{backbone_forward.6} parent=0 // pred_check
    _
  $region19: #{backbone_forward.6} parent=0 // pred_check_branch
    %121 = sbr.rel (0) target = $region21
  $region20: #{backbone_forward.6} parent=0 // pred_region
    _
  $region21: #{backbone_forward.6} parent=0 // pred_fallthru
    _

// kernel: backbone_forward.8
$region0: #{backbone_forward.8}
  #allocation0 [shape = 'u32[]', space=smem, size = 0x4, offset = 0x4, fixed_abs, tag = 'smem constant byte address 0x4 - core index']
  #allocation1 [shape = 'u32[144,128]{1,0:T(1,128)}', space=vmem, size = 0x12000, scoped, tag = 'internal scratch']
  %s0 = inlined_call_operand.vmem [shape: bf16[48,16], index: 0, kind: input, shape index: {}]
  %s1 = inlined_call_operand.vmem [shape: bf16[32,48], index: 1, kind: input, shape index: {}]
  %s2 = inlined_call_operand.vmem [shape: f32[32,1], index: 2, kind: input, shape index: {}]
  %s3 = inlined_call_operand.vmem [shape: bf16[32,16], index: 3, kind: output, shape index: {}]
  %s4 = sld [smem:[#allocation0]]
  $region22: #{backbone_forward.8} parent=0
    _
  %s6 = ssub.s32 1, %s4
  %s7 = scalar_select 0, %s6, %s4
  // Predicated region
  $region2: #{backbone_forward.8} parent=0 // pred_check
    _
  $region3: #{backbone_forward.8} parent=0 // pred_check_branch
    %9 = sbr.rel (0) target = $region5
  $region4: #{backbone_forward.8} parent=0 // pred_region
    _
  $region5: #{backbone_forward.8} parent=0 // pred_fallthru
    _
  // Predicated region
  $region6: #{backbone_forward.8} parent=0 // pred_check
    _
  $region7: #{backbone_forward.8} parent=0 // pred_check_branch
    %11 = sbr.rel (0) target = $region9
  $region8: #{backbone_forward.8} parent=0 // pred_region
    _
  $region9: #{backbone_forward.8} parent=0 // pred_fallthru
    _
  // Predicated region
  $region10: #{backbone_forward.8} parent=0 // pred_check
    _
  $region11: #{backbone_forward.8} parent=0 // pred_check_branch
    %13 = sbr.rel (0) target = $region13
  $region12: #{backbone_forward.8} parent=0 // pred_region
    _
  $region13: #{backbone_forward.8} parent=0 // pred_fallthru
    _
  %v15 = vld [vmem:[%s1] sm:$0xf]
  %v16 = vld [vmem:[%s1 + $0x4] sm:$0xf]
  %v17 = vld [vmem:[%s1 + $0x8] sm:$0xf]
  %v18 = vld [vmem:[%s1 + $0xc] sm:$0xf]
  %v19 = vld [vmem:[%s0] sm:$0xf]
  %v20 = vld [vmem:[%s0 + $0x4] sm:$0xf]
  %v21 = vld [vmem:[%s0 + $0x8] sm:$0xf]
  %v22 = vld [vmem:[%s0 + $0xc] sm:$0xf]
  %v23 = vld [vmem:[%s0 + $0x10] sm:$0xf]
  %v24 = vld [vmem:[%s0 + $0x14] sm:$0xf]
  %v25 = vld [vmem:[%s2] sm:$0xff]
  %v26 = vld [vmem:[%s2 + $0x8] sm:$0xff]
  %v27 = vld [vmem:[%s2 + $0x10] sm:$0xff]
  %v28 = vld [vmem:[%s2 + $0x18] sm:$0xff]
  %30 = vset.pattern.permute.xlu0 0
  %31 = vperm.xlu0 %30, %v25
  %v32 = vpop.permute.xlu0 %31
  %35 = vset.pattern.permute.xlu0 0
  %36 = vperm.xlu0 %35, %v26
  %v37 = vpop.permute.xlu0 %36
  %40 = vset.pattern.permute.xlu0 0
  %41 = vperm.xlu0 %40, %v27
  %v42 = vpop.permute.xlu0 %41
  %45 = vset.pattern.permute.xlu0 0
  %46 = vperm.xlu0 %45, %v28
  %v47 = vpop.permute.xlu0 %46
  %v53 = vunpack.c.l.b16 %v15
  %v54 = vunpack.c.l.b16 %v16
  %v55 = vunpack.c.l.b16 %v17
  %v56 = vunpack.c.l.b16 %v18
  %v57 = vpack.c.b16 %v54, %v53
  %v58 = vpack.c.b16 %v56, %v55
  %v65 = vunpack.c.l.b16 %v19
  %v66 = vunpack.c.l.b16 %v20
  %v67 = vunpack.c.l.b16 %v21
  %v68 = vunpack.c.l.b16 %v22
  %v69 = vunpack.c.l.b16 %v23
  %v70 = vunpack.c.l.b16 %v24
  %v71 = vpack.c.b16 %v66, %v65
  %v72 = vpack.c.b16 %v68, %v67
  %v73 = vpack.c.b16 %v70, %v69
  %vm77 = vcmask 392192
  %v79 = vsel %vm77, %v57, 0
  %v82 = vsel %vm77, %v58, 0
  %84 = vmatprep.subr.bf16.mxu0 0
  %85 = vmatpush1.bf16.msra.mxu0 %v71
  %86 = vmatprep.subr.bf16.mxu0 0
  %87 = vmatpush1.bf16.msra.mxu0 %v72
  %88 = vmatprep.subr.bf16.mxu0 0
  %89 = vmatpush1.bf16.msra.mxu0 %v73
  %90 = vmatprep.subr.bf16.mxu0 0
  %91 = vmatpush1.bf16.msra.mxu0 0
  %92 = vmatprep.subr.bf16.mxu0 0
  %93 = vmatpush1.bf16.msra.mxu0 0
  %94 = vmatprep.subr.bf16.mxu0 0
  %95 = vmatpush1.bf16.msra.mxu0 0
  %96 = vmatprep.subr.bf16.mxu0 0
  %97 = vmatpush1.bf16.msra.mxu0 0
  %98 = vmatprep.subr.bf16.mxu0 0
  %99 = vmatpush1.bf16.msra.mxu0 0
  %100 = vmatprep.subr.bf16.mxu0 0
  %101 = vmatpush1.bf16.msra.mxu0 0
  %102 = vmatprep.subr.bf16.mxu0 0
  %103 = vmatpush1.bf16.msra.mxu0 0
  %104 = vmatprep.subr.bf16.mxu0 0
  %105 = vmatpush1.bf16.msra.mxu0 0
  %106 = vmatprep.subr.bf16.mxu0 0
  %107 = vmatpush1.bf16.msra.mxu0 0
  %108 = vmatprep.subr.bf16.mxu0 0
  %109 = vmatpush1.bf16.msra.mxu0 0
  %110 = vmatprep.subr.bf16.mxu0 0
  %111 = vmatpush1.bf16.msra.mxu0 0
  %112 = vmatprep.subr.bf16.mxu0 0
  %113 = vmatpush1.bf16.msra.mxu0 0
  %114 = vmatprep.subr.bf16.mxu0 0
  %115 = vmatpush1.bf16.msra.mxu0 0
  %116 = vmatprep.mubr.bf16.mxu0 0
  %117 = vmatmul.mubr.bf16.gmra.mrb[0].mxu0 %v79
  %v118 = vpop.f32.mrb[0].mxu0
  %v119 = vadd.f32 %v32, %v118
  %v120 = vpop.f32.mrb[0].mxu0
  %v121 = vpop.f32.mrb[0].mxu0
  %v122 = vadd.f32 %v37, %v121
  %v123 = vpop.f32.mrb[0].mxu0
  %124 = vmatprep.mubr.bf16.mxu0 0
  %125 = vmatmul.mubr.bf16.gmra.mrb[0].mxu0 %v82
  %v126 = vpop.f32.mrb[0].mxu0
  %v127 = vadd.f32 %v42, %v126
  %v128 = vpop.f32.mrb[0].mxu0
  %v129 = vpop.f32.mrb[0].mxu0
  %v130 = vadd.f32 %v47, %v129
  %v131 = vpop.f32.mrb[0].mxu0
  %132 = vdwg.mxu0
  %v133 = vsub.f32 0.0, %v119
  %v134 = vsub.f32 0.0, %v122
  %v135 = vsub.f32 0.0, %v127
  %v136 = vsub.f32 0.0, %v130
  %v137 = vmul.f32 %v133, 1.442695
  %v138 = vpow.pop %v137
  %v139 = vmul.f32 %v134, 1.442695
  %v140 = vpow.pop %v139
  %v141 = vmul.f32 %v135, 1.442695
  %v142 = vpow.pop %v141
  %v143 = vmul.f32 %v136, 1.442695
  %v144 = vpow.pop %v143
  %v145 = vadd.f32 %v138, 1.0
  %v146 = vadd.f32 %v140, 1.0
  %v147 = vadd.f32 %v142, 1.0
  %v148 = vadd.f32 %v144, 1.0
  %v149 = vrcp.pop %v145
  %v150 = vrcp.pop %v146
  %v151 = vrcp.pop %v147
  %v152 = vrcp.pop %v148
  %v153 = vmul.f32 %v119, %v149
  %v154 = vmul.f32 %v122, %v150
  %v155 = vmul.f32 %v127, %v151
  %v156 = vmul.f32 %v130, %v152
  %v157 = vpack.c.bf16 %v154, %v153
  %v158 = vpack.c.bf16 %v156, %v155
  %v161 = vunpack.c.l.b16 %v157
  %v162 = vunpack.c.h.b16 %v157
  %v163 = vunpack.c.l.b16 %v158
  %v164 = vunpack.c.h.b16 %v158
  %v165 = vpack.c.b16 %v161, %v161
  %v166 = vpack.c.b16 %v162, %v162
  %v167 = vpack.c.b16 %v163, %v163
  %v168 = vpack.c.b16 %v164, %v164
  %vm173 = vcmask 125952
  %174 = vst.msk [vmem:[%s3] sm:$0xf] %vm173, %v165
  %175 = vst.msk [vmem:[%s3 + $0x4] sm:$0xf] %vm173, %v166
  %176 = vst.msk [vmem:[%s3 + $0x8] sm:$0xf] %vm173, %v167
  %177 = vst.msk [vmem:[%s3 + $0xc] sm:$0xf] %vm173, %v168
  // Predicated region
  $region14: #{backbone_forward.8} parent=0 // pred_check
    _
  $region15: #{backbone_forward.8} parent=0 // pred_check_branch
    %179 = sbr.rel (0) target = $region17
  $region16: #{backbone_forward.8} parent=0 // pred_region
    _
  $region17: #{backbone_forward.8} parent=0 // pred_fallthru
    _
  // Predicated region
  $region18: #{backbone_forward.8} parent=0 // pred_check
    _
  $region19: #{backbone_forward.8} parent=0 // pred_check_branch
    %181 = sbr.rel (0) target = $region21
  $region20: #{backbone_forward.8} parent=0 // pred_region
    _
  $region21: #{backbone_forward.8} parent=0 // pred_fallthru
    _

// kernel: backbone_forward.9
$region0: #{backbone_forward.9}
  #allocation0 [shape = 'u32[]', space=smem, size = 0x4, offset = 0x4, fixed_abs, tag = 'smem constant byte address 0x4 - core index']
  #allocation1 [shape = 'u32[144,128]{1,0:T(1,128)}', space=vmem, size = 0x12000, scoped, tag = 'internal scratch']
  %s0 = inlined_call_operand.vmem [shape: bf16[32,16], index: 0, kind: input, shape index: {}]
  %s1 = inlined_call_operand.vmem [shape: bf16[32,32], index: 1, kind: input, shape index: {}]
  %s2 = inlined_call_operand.vmem [shape: f32[32,1], index: 2, kind: input, shape index: {}]
  %s3 = inlined_call_operand.vmem [shape: bf16[8,16], index: 3, kind: input, shape index: {}]
  %s4 = inlined_call_operand.vmem [shape: f32[8,1], index: 4, kind: input, shape index: {}]
  %s5 = inlined_call_operand.vmem [shape: bf16[16,8], index: 5, kind: input, shape index: {}]
  %s6 = inlined_call_operand.vmem [shape: f32[16,1], index: 6, kind: input, shape index: {}]
  %s7 = inlined_call_operand.vmem [shape: bf16[32,16], index: 7, kind: output, shape index: {}]
  %s8 = sld [smem:[#allocation0]]
  $region38: #{backbone_forward.9} parent=0
    _
  %s10 = ssub.s32 1, %s8
  %s11 = scalar_select 0, %s10, %s8
  // Predicated region
  $region2: #{backbone_forward.9} parent=0 // pred_check
    _
  $region3: #{backbone_forward.9} parent=0 // pred_check_branch
    %13 = sbr.rel (0) target = $region5
  $region4: #{backbone_forward.9} parent=0 // pred_region
    _
  $region5: #{backbone_forward.9} parent=0 // pred_fallthru
    _
  // Predicated region
  $region6: #{backbone_forward.9} parent=0 // pred_check
    _
  $region7: #{backbone_forward.9} parent=0 // pred_check_branch
    %15 = sbr.rel (0) target = $region9
  $region8: #{backbone_forward.9} parent=0 // pred_region
    _
  $region9: #{backbone_forward.9} parent=0 // pred_fallthru
    _
  // Predicated region
  $region10: #{backbone_forward.9} parent=0 // pred_check
    _
  $region11: #{backbone_forward.9} parent=0 // pred_check_branch
    %17 = sbr.rel (0) target = $region13
  $region12: #{backbone_forward.9} parent=0 // pred_region
    _
  $region13: #{backbone_forward.9} parent=0 // pred_fallthru
    _
  // Predicated region
  $region14: #{backbone_forward.9} parent=0 // pred_check
    _
  $region15: #{backbone_forward.9} parent=0 // pred_check_branch
    %19 = sbr.rel (0) target = $region17
  $region16: #{backbone_forward.9} parent=0 // pred_region
    _
  $region17: #{backbone_forward.9} parent=0 // pred_fallthru
    _
  // Predicated region
  $region18: #{backbone_forward.9} parent=0 // pred_check
    _
  $region19: #{backbone_forward.9} parent=0 // pred_check_branch
    %21 = sbr.rel (0) target = $region21
  $region20: #{backbone_forward.9} parent=0 // pred_region
    _
  $region21: #{backbone_forward.9} parent=0 // pred_fallthru
    _
  // Predicated region
  $region22: #{backbone_forward.9} parent=0 // pred_check
    _
  $region23: #{backbone_forward.9} parent=0 // pred_check_branch
    %23 = sbr.rel (0) target = $region25
  $region24: #{backbone_forward.9} parent=0 // pred_region
    _
  $region25: #{backbone_forward.9} parent=0 // pred_fallthru
    _
  // Predicated region
  $region26: #{backbone_forward.9} parent=0 // pred_check
    _
  $region27: #{backbone_forward.9} parent=0 // pred_check_branch
    %25 = sbr.rel (0) target = $region29
  $region28: #{backbone_forward.9} parent=0 // pred_region
    _
  $region29: #{backbone_forward.9} parent=0 // pred_fallthru
    _
  %v27 = vld [vmem:[%s0] sm:$0xf]
  %v28 = vld [vmem:[%s0 + $0x4] sm:$0xf]
  %v29 = vld [vmem:[%s0 + $0x8] sm:$0xf]
  %v30 = vld [vmem:[%s0 + $0xc] sm:$0xf]
  %v31 = vunpack.c.l.bf16 %v27
  %v32 = vunpack.c.l.bf16 %v28
  %v33 = vunpack.c.l.bf16 %v29
  %v34 = vunpack.c.l.bf16 %v30
  %v35 = vld [vmem:[%s1] sm:$0xf]
  %v36 = vld [vmem:[%s1 + $0x4] sm:$0xf]
  %v37 = vld [vmem:[%s1 + $0x8] sm:$0xf]
  %v38 = vld [vmem:[%s1 + $0xc] sm:$0xf]
  %v39 = vld [vmem:[%s2] sm:$0xff]
  %v40 = vld [vmem:[%s2 + $0x8] sm:$0xff]
  %v41 = vld [vmem:[%s2 + $0x10] sm:$0xff]
  %v42 = vld [vmem:[%s2 + $0x18] sm:$0xff]
  %44 = vset.pattern.permute.xlu0 0
  %45 = vperm.xlu0 %44, %v39
  %v46 = vpop.permute.xlu0 %45
  %49 = vset.pattern.permute.xlu0 0
  %50 = vperm.xlu0 %49, %v40
  %v51 = vpop.permute.xlu0 %50
  %54 = vset.pattern.permute.xlu0 0
  %55 = vperm.xlu0 %54, %v41
  %v56 = vpop.permute.xlu0 %55
  %59 = vset.pattern.permute.xlu0 0
  %60 = vperm.xlu0 %59, %v42
  %v61 = vpop.permute.xlu0 %60
  %v67 = vunpack.c.l.b16 %v35
  %v68 = vunpack.c.l.b16 %v36
  %v69 = vunpack.c.l.b16 %v37
  %v70 = vunpack.c.l.b16 %v38
  %v71 = vpack.c.b16 %v68, %v67
  %v72 = vpack.c.b16 %v70, %v69
  %v77 = vunpack.c.l.b16 %v27
  %v78 = vunpack.c.l.b16 %v28
  %v79 = vunpack.c.l.b16 %v29
  %v80 = vunpack.c.l.b16 %v30
  %v81 = vpack.c.b16 %v78, %v77
  %v82 = vpack.c.b16 %v80, %v79
  %vm85 = vcmask 261120
  %v87 = vsel %vm85, %v71, 0
  %v90 = vsel %vm85, %v72, 0
  %92 = vmatprep.subr.bf16.mxu0 0
  %93 = vmatpush1.bf16.msra.mxu0 %v81
  %94 = vmatprep.subr.bf16.mxu0 0
  %95 = vmatpush1.bf16.msra.mxu0 %v82
  %96 = vmatprep.subr.bf16.mxu0 0
  %97 = vmatpush1.bf16.msra.mxu0 0
  %98 = vmatprep.subr.bf16.mxu0 0
  %99 = vmatpush1.bf16.msra.mxu0 0
  %100 = vmatprep.subr.bf16.mxu0 0
  %101 = vmatpush1.bf16.msra.mxu0 0
  %102 = vmatprep.subr.bf16.mxu0 0
  %103 = vmatpush1.bf16.msra.mxu0 0
  %104 = vmatprep.subr.bf16.mxu0 0
  %105 = vmatpush1.bf16.msra.mxu0 0
  %106 = vmatprep.subr.bf16.mxu0 0
  %107 = vmatpush1.bf16.msra.mxu0 0
  %108 = vmatprep.subr.bf16.mxu0 0
  %109 = vmatpush1.bf16.msra.mxu0 0
  %110 = vmatprep.subr.bf16.mxu0 0
  %111 = vmatpush1.bf16.msra.mxu0 0
  %112 = vmatprep.subr.bf16.mxu0 0
  %113 = vmatpush1.bf16.msra.mxu0 0
  %114 = vmatprep.subr.bf16.mxu0 0
  %115 = vmatpush1.bf16.msra.mxu0 0
  %116 = vmatprep.subr.bf16.mxu0 0
  %117 = vmatpush1.bf16.msra.mxu0 0
  %118 = vmatprep.subr.bf16.mxu0 0
  %119 = vmatpush1.bf16.msra.mxu0 0
  %120 = vmatprep.subr.bf16.mxu0 0
  %121 = vmatpush1.bf16.msra.mxu0 0
  %122 = vmatprep.subr.bf16.mxu0 0
  %123 = vmatpush1.bf16.msra.mxu0 0
  %124 = vmatprep.mubr.bf16.mxu0 0
  %125 = vmatmul.mubr.bf16.gmra.mrb[0].mxu0 %v87
  %v126 = vpop.f32.mrb[0].mxu0
  %v127 = vadd.f32 %v46, %v126
  %v128 = vpop.f32.mrb[0].mxu0
  %v129 = vpop.f32.mrb[0].mxu0
  %v130 = vadd.f32 %v51, %v129
  %v131 = vpop.f32.mrb[0].mxu0
  %132 = vmatprep.mubr.bf16.mxu0 0
  %133 = vmatmul.mubr.bf16.gmra.mrb[0].mxu0 %v90
  %v134 = vpop.f32.mrb[0].mxu0
  %v135 = vadd.f32 %v56, %v134
  %v136 = vpop.f32.mrb[0].mxu0
  %v137 = vpop.f32.mrb[0].mxu0
  %v138 = vadd.f32 %v61, %v137
  %v139 = vpop.f32.mrb[0].mxu0
  %140 = vdwg.mxu0
  %v141 = vsub.f32 0.0, %v127
  %v142 = vsub.f32 0.0, %v130
  %v143 = vsub.f32 0.0, %v135
  %v144 = vsub.f32 0.0, %v138
  %v145 = vmul.f32 %v141, 1.442695
  %v146 = vpow.pop %v145
  %v147 = vmul.f32 %v142, 1.442695
  %v148 = vpow.pop %v147
  %v149 = vmul.f32 %v143, 1.442695
  %v150 = vpow.pop %v149
  %v151 = vmul.f32 %v144, 1.442695
  %v152 = vpow.pop %v151
  %v153 = vadd.f32 %v146, 1.0
  %v154 = vadd.f32 %v148, 1.0
  %v155 = vadd.f32 %v150, 1.0
  %v156 = vadd.f32 %v152, 1.0
  %v157 = vrcp.pop %v153
  %v158 = vrcp.pop %v154
  %v159 = vrcp.pop %v155
  %v160 = vrcp.pop %v156
  %v161 = vmul.f32 %v127, %v157
  %v162 = vmul.f32 %v130, %v158
  %v163 = vmul.f32 %v135, %v159
  %v164 = vmul.f32 %v138, %v160
  %v165 = vadd.f32 %v161, %v31
  %v166 = vadd.f32 %v162, %v32
  %v167 = vpack.c.bf16 %v166, %v165
  %v169 = vunpack.c.l.b16 %v167
  %v170 = vunpack.c.h.b16 %v167
  %v171 = vpack.c.b16 %v169, %v169
  %v172 = vpack.c.b16 %v170, %v170
  %vm175 = vcmask 125952
  %176 = vst.msk [vmem:[%s7] sm:$0xf] %vm175, %v171
  %177 = vst.msk [vmem:[%s7 + $0x4] sm:$0xf] %vm175, %v172
  %v178 = vld [vmem:[%s3] sm:$0xf]
  %v179 = vpack.c.bf16 %v164, %v163
  %v180 = vld [vmem:[%s4] sm:$0xff]
  %182 = vset.pattern.permute.xlu0 0
  %183 = vperm.xlu0 %182, %v180
  %v184 = vpop.permute.xlu0 %183
  %vm186 = vcmask 130048
  %v188 = vsel %vm186, %v178, 0
  %190 = vmatprep.subr.bf16.mxu0 0
  %191 = vmatpush1.bf16.msra.mxu0 %v179
  %192 = vmatprep.subr.bf16.mxu0 0
  %193 = vmatpush1.bf16.msra.mxu0 0
  %194 = vmatprep.subr.bf16.mxu0 0
  %195 = vmatpush1.bf16.msra.mxu0 0
  %196 = vmatprep.subr.bf16.mxu0 0
  %197 = vmatpush1.bf16.msra.mxu0 0
  %198 = vmatprep.subr.bf16.mxu0 0
  %199 = vmatpush1.bf16.msra.mxu0 0
  %200 = vmatprep.subr.bf16.mxu0 0
  %201 = vmatpush1.bf16.msra.mxu0 0
  %202 = vmatprep.subr.bf16.mxu0 0
  %203 = vmatpush1.bf16.msra.mxu0 0
  %204 = vmatprep.subr.bf16.mxu0 0
  %205 = vmatpush1.bf16.msra.mxu0 0
  %206 = vmatprep.subr.bf16.mxu0 0
  %207 = vmatpush1.bf16.msra.mxu0 0
  %208 = vmatprep.subr.bf16.mxu0 0
  %209 = vmatpush1.bf16.msra.mxu0 0
  %210 = vmatprep.subr.bf16.mxu0 0
  %211 = vmatpush1.bf16.msra.mxu0 0
  %212 = vmatprep.subr.bf16.mxu0 0
  %213 = vmatpush1.bf16.msra.mxu0 0
  %214 = vmatprep.subr.bf16.mxu0 0
  %215 = vmatpush1.bf16.msra.mxu0 0
  %216 = vmatprep.subr.bf16.mxu0 0
  %217 = vmatpush1.bf16.msra.mxu0 0
  %218 = vmatprep.subr.bf16.mxu0 0
  %219 = vmatpush1.bf16.msra.mxu0 0
  %220 = vmatprep.subr.bf16.mxu0 0
  %221 = vmatpush1.bf16.msra.mxu0 0
  %222 = vmatprep.mubr.bf16.mxu0 0
  %223 = vmatmul.mubr.bf16.gmra.mrb[0].mxu0 %v188
  %v224 = vpop.f32.mrb[0].mxu0
  %v225 = vadd.f32 %v184, %v224
  %v226 = vpop.f32.mrb[0].mxu0
  %v227 = vpop.f32.mrb[0].mxu0
  %v228 = vpop.f32.mrb[0].mxu0
  %229 = vdwg.mxu0
  %v230 = vsub.f32 0.0, %v225
  %v231 = vmul.f32 %v230, 1.442695
  %v232 = vpow.pop %v231
  %v233 = vadd.f32 %v232, 1.0
  %v234 = vrcp.pop %v233
  %v235 = vmul.f32 %v225, %v234
  %v236 = vld [vmem:[%s5] sm:$0xf]
  %v237 = vld [vmem:[%s5 + $0x4] sm:$0xf]
  %v238 = vpack.c.bf16 %v235, %v235
  %v239 = vld [vmem:[%s6] sm:$0xff]
  %v240 = vld [vmem:[%s6 + $0x8] sm:$0xff]
  %242 = vset.pattern.permute.xlu0 0
  %243 = vperm.xlu0 %242, %v239
  %v244 = vpop.permute.xlu0 %243
  %247 = vset.pattern.permute.xlu0 0
  %248 = vperm.xlu0 %247, %v240
  %v249 = vpop.permute.xlu0 %248
  %v253 = vunpack.c.l.b16 %v236
  %v254 = vunpack.c.l.b16 %v237
  %v255 = vpack.c.b16 %v254, %v253
  %vm256 = vcmask 64512
  %v258 = vsel %vm256, %v255, 0
  %vm260 = vcmask 1043456
  %v262 = vsel %vm260, %v238, 0
  %264 = vmatprep.subr.bf16.mxu0 0
  %265 = vmatpush1.bf16.msra.mxu0 %v262
  %266 = vmatprep.subr.bf16.mxu0 0
  %267 = vmatpush1.bf16.msra.mxu0 0
  %268 = vmatprep.subr.bf16.mxu0 0
  %269 = vmatpush1.bf16.msra.mxu0 0
  %270 = vmatprep.subr.bf16.mxu0 0
  %271 = vmatpush1.bf16.msra.mxu0 0
  %272 = vmatprep.subr.bf16.mxu0 0
  %273 = vmatpush1.bf16.msra.mxu0 0
  %274 = vmatprep.subr.bf16.mxu0 0
  %275 = vmatpush1.bf16.msra.mxu0 0
  %276 = vmatprep.subr.bf16.mxu0 0
  %277 = vmatpush1.bf16.msra.mxu0 0
  %278 = vmatprep.subr.bf16.mxu0 0
  %279 = vmatpush1.bf16.msra.mxu0 0
  %280 = vmatprep.subr.bf16.mxu0 0
  %281 = vmatpush1.bf16.msra.mxu0 0
  %282 = vmatprep.subr.bf16.mxu0 0
  %283 = vmatpush1.bf16.msra.mxu0 0
  %284 = vmatprep.subr.bf16.mxu0 0
  %285 = vmatpush1.bf16.msra.mxu0 0
  %286 = vmatprep.subr.bf16.mxu0 0
  %287 = vmatpush1.bf16.msra.mxu0 0
  %288 = vmatprep.subr.bf16.mxu0 0
  %289 = vmatpush1.bf16.msra.mxu0 0
  %290 = vmatprep.subr.bf16.mxu0 0
  %291 = vmatpush1.bf16.msra.mxu0 0
  %292 = vmatprep.subr.bf16.mxu0 0
  %293 = vmatpush1.bf16.msra.mxu0 0
  %294 = vmatprep.subr.bf16.mxu0 0
  %295 = vmatpush1.bf16.msra.mxu0 0
  %296 = vmatprep.mubr.bf16.mxu0 0
  %297 = vmatmul.mubr.bf16.gmra.mrb[0].mxu0 %v258
  %v298 = vpop.f32.mrb[0].mxu0
  %v299 = vadd.f32 %v244, %v298
  %v300 = vpop.f32.mrb[0].mxu0
  %v301 = vpop.f32.mrb[0].mxu0
  %v302 = vadd.f32 %v249, %v301
  %v303 = vpop.f32.mrb[0].mxu0
  %304 = vdwg.mxu0
  %v305 = vsub.f32 0.0, %v299
  %v306 = vsub.f32 0.0, %v302
  %v307 = vmul.f32 %v305, 1.442695
  %v308 = vpow.pop %v307
  %v309 = vmul.f32 %v306, 1.442695
  %v310 = vpow.pop %v309
  %v311 = vadd.f32 %v308, 1.0
  %v312 = vadd.f32 %v310, 1.0
  %v313 = vrcp.pop %v311
  %v314 = vrcp.pop %v312
  %v315 = vmul.f32 %v299, %v313
  %v316 = vmul.f32 %v302, %v314
  %v317 = vadd.f32 %v315, %v163
  %v318 = vadd.f32 %v316, %v164
  %v319 = vadd.f32 %v317, %v33
  %v320 = vadd.f32 %v318, %v34
  %v321 = vpack.c.bf16 %v320, %v319
  %v323 = vunpack.c.l.b16 %v321
  %v324 = vunpack.c.h.b16 %v321
  %v325 = vpack.c.b16 %v323, %v323
  %v326 = vpack.c.b16 %v324, %v324
  %329 = vst.msk [vmem:[%s7 + $0x8] sm:$0xf] %vm175, %v325
  %330 = vst.msk [vmem:[%s7 + $0xc] sm:$0xf] %vm175, %v326
  // Predicated region
  $region30: #{backbone_forward.9} parent=0 // pred_check
    _
  $region31: #{backbone_forward.9} parent=0 // pred_check_branch
    %332 = sbr.rel (0) target = $region33
  $region32: #{backbone_forward.9} parent=0 // pred_region
    _
  $region33: #{backbone_forward.9} parent=0 // pred_fallthru
    _
  // Predicated region
  $region34: #{backbone_forward.9} parent=0 // pred_check
    _
  $region35: #{backbone_forward.9} parent=0 // pred_check_branch
    %334 = sbr.rel (0) target = $region37
  $region36: #{backbone_forward.9} parent=0 // pred_region
    _
  $region37: #{backbone_forward.9} parent=0 // pred_fallthru
    _

</llo_original>
